<compile_context>
chip_gen: v7x
topology: tpu7x:2x2x1
jax: 0.10.0
libtpu: 0.0.40
codegen_flags: <defaults>
</compile_context>

<pallas_src>
import math

import numpy as np
import jax
import jax.numpy as jnp
from jax.experimental import pallas as pl
from jax.experimental.pallas import tpu as pltpu

# ------------------------- circuit configuration ----------------------------
N_QUBITS = 4                     # `size` of BasicClassifierTorch
DIM = 1 << N_QUBITS              # 2**n statevector dimension
N_REUPLOADS = 2                  # n_reuploads
N_LAYERS = 2                     # ansatz depth -> weight_shapes = {"params": (R, L, n)}
WEIGHTS_INIT_MAX_VAL = 2.0 * math.pi

B_TILE_MAX = 4096                # max batch tile on the lane axis (sweepable)
B_TILE_ALIGN = 256               # multiple of 256: full-width MXU RHS on v6e/v7x


# --------------------- static (angle-independent) matrices ------------------
def _build_static_matrices():
    """S_q signed-swap matrices and CNOT-ring permutation (column convention:
    new_state = M @ state_col)."""
    n, D = N_QUBITS, DIM
    s_mats = np.zeros((n, D, D), dtype=np.float32)
    for q in range(n):
        shift = n - 1 - q                       # wire 0 = most-significant bit
        mask = 1 << shift
        for i in range(D):
            bit = (i >> shift) & 1
            s_mats[q, i, i ^ mask] = 1.0 if bit == 1 else -1.0

    def cnot_matrix(c, t):
        P = np.zeros((D, D), dtype=np.float32)
        sc, st = n - 1 - c, n - 1 - t
        for i in range(D):
            src = (i ^ (1 << st)) if ((i >> sc) & 1) else i
            P[i, src] = 1.0
        return P

    pring = np.eye(D, dtype=np.float32)
    for w in range(n):                           # CNOT(0,1), CNOT(1,2), ..., CNOT(n-1,0)
        pring = cnot_matrix(w, (w + 1) % n) @ pring
    return s_mats, pring


_S_MATS_NP, _P_RING_NP = _build_static_matrices()


# ------------- ansatz pre-composition (batch-independent, tiny) --------------
def _compose_ansatz_unitaries(params):
    """Fold each reupload's N_LAYERS x (RYs + CNOT ring) into one DIM x DIM matrix.

    This work depends only on params (not on the batch), so it is done once per
    call in plain JAX, off the per-batch critical path.
    """
    params = params.reshape(N_REUPLOADS, N_LAYERS, N_QUBITS).astype(jnp.float32)
    c = jnp.cos(params * 0.5)
    s = jnp.sin(params * 0.5)
    eye = jnp.asarray(np.eye(DIM, dtype=np.float32))
    smats = jnp.asarray(_S_MATS_NP)
    pring = jnp.asarray(_P_RING_NP)
    hp = jax.lax.Precision.HIGHEST
    us = []
    for r in range(N_REUPLOADS):
        u = eye
        for l in range(N_LAYERS):
            for q in range(N_QUBITS):            # RY(th) = cos*I + sin*S_q
                rq = c[r, l, q] * eye + s[r, l, q] * smats[q]
                u = jnp.dot(rq, u, precision=hp)
            u = jnp.dot(pring, u, precision=hp)
        us.append(u)
    return jnp.stack(us, axis=0)                 # (N_REUPLOADS, DIM, DIM)


# ------------------------------ Pallas kernel --------------------------------
def circuit_kernel(xt_ref, u_ref, out_ref):
    """Statevector simulation for one lane-dense batch tile.

    xt_ref  : (N_QUBITS, b_tile)        feature-map angles, batch on lanes
    u_ref   : (N_REUPLOADS, DIM, DIM)   pre-composed ansatz unitaries (column conv.)
    out_ref : (1, b_tile)               <Z_0> per batch element (lane-dense store)
    """
    # Half-angle trig: computed once, reused by every reupload.
    # (sin via sqrt(1-c^2) on the EUP is only worthwhile if profiling shows the
    # trig VALU slot binding, and needs a sign fix for |x/2| > pi -- keep jnp.sin.)
    xc = jnp.cos(xt_ref[...] * 0.5)              # (N_QUBITS, b_tile)
    xs = jnp.sin(xt_ref[...] * 0.5)

    # Loop-invariant (DIM, 1) per-qubit bit masks (wire 0 = MSB); lane-broadcast
    # by the VPU so no (DIM, b_tile) bool temporaries are materialized.
    col = jax.lax.broadcasted_iota(jnp.int32, (DIM, 1), 0)
    bits = [((col >> (N_QUBITS - 1 - q)) & 1) == 1 for q in range(N_QUBITS)]

    # ---- reupload 0: post-feature-map state of |0..0> is a product state -----
    #      state[i, b] = prod_q (bit_q(i) ? sin(x_qb/2) : cos(x_qb/2))
    state = jnp.where(bits[0], xs[0:1, :], xc[0:1, :])
    for q in range(1, N_QUBITS):
        state = state * jnp.where(bits[q], xs[q:q + 1, :], xc[q:q + 1, :])
    # composed ansatz of reupload 0: one MXU matmul, f32 accumulate
    state = jnp.dot(u_ref[0], state, preferred_element_type=jnp.float32)

    # ---- remaining reuploads: data-dependent RYs via XLU rolls + VPU selects --
    for r in range(1, N_REUPLOADS):
        for q in range(N_QUBITS):
            shift = N_QUBITS - 1 - q
            mask = 1 << shift
            # signed partner swap: flipped[i] = +state[i-mask] if bit_q(i)==1
            #                                   -state[i+mask] if bit_q(i)==0
            roll_dn = pltpu.roll(state, shift=mask, axis=0)        # state[i - mask]
            if 2 * mask == DIM:                  # q == 0: shift 8 == DIM-8, reuse
                roll_up = roll_dn
            else:
                roll_up = pltpu.roll(state, shift=DIM - mask, axis=0)  # state[i + mask]
            flipped = jnp.where(bits[q], roll_dn, -roll_up)
            state = xc[q:q + 1, :] * state + xs[q:q + 1, :] * flipped
        # composed ansatz of this reupload: one MXU matmul
        state = jnp.dot(u_ref[r], state, preferred_element_type=jnp.float32)

    # <Z_0> (wire 0 = MSB, state real): sum of squared amplitudes of the MSB=0
    # half minus the MSB=1 half, using static sublane-aligned slices.
    sq = state * state
    out_ref[...] = (jnp.sum(sq[:DIM // 2], axis=0, keepdims=True)
                    - jnp.sum(sq[DIM // 2:], axis=0, keepdims=True))


# ------------------------------ wrapper ---------------------------------------
def _choose_tiling(batch):
    """Pick (b_tile, n_tiles): b_tile a multiple of 256, and >=2 grid steps
    whenever the batch allows so both v7x TensorCores are used via the
    "parallel" grid axis (harmless on the single-core v5e/v6e)."""
    n_tiles = max(1, pl.cdiv(batch, B_TILE_MAX))
    if n_tiles == 1 and batch > B_TILE_ALIGN:
        n_tiles = 2
    if n_tiles > 1 and n_tiles % 2:
        n_tiles += 1                              # even split across 2 cores
    b_tile = pl.cdiv(pl.cdiv(batch, n_tiles), B_TILE_ALIGN) * B_TILE_ALIGN
    return b_tile, pl.cdiv(batch, b_tile)


@jax.jit
def basic_model_torch_layer_forward(x, params):
    """Equivalent of BasicModelTorchLayer.forward(x): x (B, n_qubits) -> (B,)."""
    B = x.shape[0]
    b_tile, n_tiles = _choose_tiling(B)
    b_pad = n_tiles * b_tile

    # Angles with batch on the lane axis, zero-padded to whole tiles.  The
    # pad+transpose is marked fusible into the pallas_call input DMA below
    # (allow_input_fusion) so it does not cost a separate HBM round trip.
    xt = jnp.zeros((N_QUBITS, b_pad), jnp.float32).at[:, :B].set(
        x.astype(jnp.float32).T)
    # Batch-independent ansatz folded into one 16x16 unitary per reupload;
    # params never enter the kernel.
    u_stack = _compose_ansatz_unitaries(params)

    out = pl.pallas_call(
        circuit_kernel,
        out_shape=jax.ShapeDtypeStruct((1, b_pad), jnp.float32),
        grid_spec=pltpu.PrefetchScalarGridSpec(
            num_scalar_prefetch=0,
            grid=(n_tiles,),
            in_specs=[
                # batch-tiled angles
                pl.BlockSpec((N_QUBITS, b_tile), lambda i: (0, i)),
                # tiny per-call-constant unitaries: constant index_map -> DMA'd once
                pl.BlockSpec((N_REUPLOADS, DIM, DIM), lambda i: (0, 0, 0)),
            ],
            out_specs=pl.BlockSpec((1, b_tile), lambda i: (0, i)),
        ),
        compiler_params=pltpu.CompilerParams(
            dimension_semantics=("parallel",),       # batch tiles -> both TCs on v7x
            allow_input_fusion=[True, False],        # fuse xt's pad+transpose producer
        ),
    )(xt, u_stack)
    return out[0, :B]


# --------------------- independent pure-JAX reference -------------------------
def reference_forward(x, params):
    """Gate-by-gate statevector simulation (gather-based, no matmuls, no shared
    static matrices) for cross-checking the kernel's roll/compose tricks."""
    x = x.astype(jnp.float32)
    params = params.astype(jnp.float32)
    B = x.shape[0]
    state = jnp.zeros((B, DIM), jnp.float32).at[:, 0].set(1.0)
    idx = np.arange(DIM)

    def ry(state, theta, q):
        shift = N_QUBITS - 1 - q
        mask = 1 << shift
        partner = state[:, idx ^ mask]
        sign = (2.0 * ((idx >> shift) & 1) - 1.0).astype(np.float32)
        c = jnp.cos(theta * 0.5)
        s = jnp.sin(theta * 0.5)
        if jnp.ndim(c) == 1:
            c, s = c[:, None], s[:, None]
        return c * state + s * sign[None, :] * partner

    def cnot(state, ctrl, tgt):
        sc, st = N_QUBITS - 1 - ctrl, N_QUBITS - 1 - tgt
        src = np.where((idx >> sc) & 1, idx ^ (1 << st), idx)
        return state[:, src]

    for r in range(N_REUPLOADS):
        for q in range(N_QUBITS):
            state = ry(state, x[:, q], q)
        for l in range(N_LAYERS):
            for q in range(N_QUBITS):
                state = ry(state, params[r, l, q], q)
            for w in range(N_QUBITS):
                state = cnot(state, w, (w + 1) % N_QUBITS)

    zsign = (1.0 - 2.0 * ((idx >> (N_QUBITS - 1)) & 1)).astype(np.float32)
    return jnp.sum(state * state * zsign[None, :], axis=1)


# ------------------------------- main ------------------------------------------
if __name__ == "__main__":
    key = jax.random.PRNGKey(0)
    k_x, k_w = jax.random.split(key)

    # weights: torch.nn.init.uniform_(b=2*pi) on shape (n_reuploads, n_layers, n_qubits)
    params = jax.random.uniform(k_w, (N_REUPLOADS, N_LAYERS, N_QUBITS), jnp.float32,
                                minval=0.0, maxval=WEIGHTS_INIT_MAX_VAL)

    # small batch, consistent with the module's forward (B, n_qubits)
    for batch in (8, 300, 1500):
        xb = jax.random.uniform(k_x, (batch, N_QUBITS), jnp.float32,
                                minval=0.0, maxval=math.pi)
        out = jax.block_until_ready(basic_model_torch_layer_forward(xb, params))
        assert out.shape == (batch,)
        np.testing.assert_allclose(np.asarray(out),
                                   np.asarray(reference_forward(xb, params)),
                                   atol=2e-4, rtol=2e-4)

    print("KERNEL_OK")
</pallas_src>

<mosaic_0001>
module attributes {stable_mosaic.version = 11 : i64} {
  func.func @circuit_kernel(%arg0: i32, %arg1: memref<4x256xf32, #tpu.memory_space<vmem>>, %arg2: memref<2x16x16xf32, #tpu.memory_space<vmem>>, %arg3: memref<1x256xf32, #tpu.memory_space<vmem>>) attributes {dimension_semantics = [#tpu.dimension_semantics<parallel>], iteration_bounds = array<i64: 1>, scalar_prefetch = 0 : i64, scratch_operands = 0 : i64, tpu.core_type = #tpu.core_type<tc>, window_params = [{transform_indices = @transform_0, window_bounds = array<i64: 4, 256>}, {pipeline_mode = #tpu.pipeline_mode<synchronous>, transform_indices = @transform_1, window_bounds = array<i64: 2, 16, 16>}, {transform_indices = @transform_2, window_bounds = array<i64: 1, 256>}]} {
    %c0 = arith.constant 0 : index
    %c0_0 = arith.constant 0 : index
    %0 = vector.load %arg1[%c0, %c0_0] : memref<4x256xf32, #tpu.memory_space<vmem>>, vector<4x256xf32>
    %cst = arith.constant 5.000000e-01 : f32
    %1 = vector.broadcast %cst : f32 to vector<4x256xf32>
    %2 = arith.mulf %0, %1 : vector<4x256xf32>
    %3 = math.cos %2 : vector<4x256xf32>
    %c0_1 = arith.constant 0 : index
    %c0_2 = arith.constant 0 : index
    %4 = vector.load %arg1[%c0_1, %c0_2] : memref<4x256xf32, #tpu.memory_space<vmem>>, vector<4x256xf32>
    %cst_3 = arith.constant 5.000000e-01 : f32
    %5 = vector.broadcast %cst_3 : f32 to vector<4x256xf32>
    %6 = arith.mulf %4, %5 : vector<4x256xf32>
    %7 = math.sin %6 : vector<4x256xf32>
    %8 = tpu.iota {dimensions = array<i32: 0>} : vector<16x1xi32>
    %c3_i32 = arith.constant 3 : i32
    %9 = vector.broadcast %c3_i32 : i32 to vector<16x1xi32>
    %10 = arith.shrsi %8, %9 : vector<16x1xi32>
    %c1_i32 = arith.constant 1 : i32
    %11 = vector.broadcast %c1_i32 : i32 to vector<16x1xi32>
    %12 = arith.andi %10, %11 : vector<16x1xi32>
    %c1_i32_4 = arith.constant 1 : i32
    %13 = vector.broadcast %c1_i32_4 : i32 to vector<16x1xi32>
    %14 = arith.cmpi eq, %12, %13 : vector<16x1xi32>
    %c2_i32 = arith.constant 2 : i32
    %15 = vector.broadcast %c2_i32 : i32 to vector<16x1xi32>
    %16 = arith.shrsi %8, %15 : vector<16x1xi32>
    %c1_i32_5 = arith.constant 1 : i32
    %17 = vector.broadcast %c1_i32_5 : i32 to vector<16x1xi32>
    %18 = arith.andi %16, %17 : vector<16x1xi32>
    %c1_i32_6 = arith.constant 1 : i32
    %19 = vector.broadcast %c1_i32_6 : i32 to vector<16x1xi32>
    %20 = arith.cmpi eq, %18, %19 : vector<16x1xi32>
    %c1_i32_7 = arith.constant 1 : i32
    %21 = vector.broadcast %c1_i32_7 : i32 to vector<16x1xi32>
    %22 = arith.shrsi %8, %21 : vector<16x1xi32>
    %c1_i32_8 = arith.constant 1 : i32
    %23 = vector.broadcast %c1_i32_8 : i32 to vector<16x1xi32>
    %24 = arith.andi %22, %23 : vector<16x1xi32>
    %c1_i32_9 = arith.constant 1 : i32
    %25 = vector.broadcast %c1_i32_9 : i32 to vector<16x1xi32>
    %26 = arith.cmpi eq, %24, %25 : vector<16x1xi32>
    %c0_i32 = arith.constant 0 : i32
    %27 = vector.broadcast %c0_i32 : i32 to vector<16x1xi32>
    %28 = arith.shrsi %8, %27 : vector<16x1xi32>
    %c1_i32_10 = arith.constant 1 : i32
    %29 = vector.broadcast %c1_i32_10 : i32 to vector<16x1xi32>
    %30 = arith.andi %28, %29 : vector<16x1xi32>
    %c1_i32_11 = arith.constant 1 : i32
    %31 = vector.broadcast %c1_i32_11 : i32 to vector<16x1xi32>
    %32 = arith.cmpi eq, %30, %31 : vector<16x1xi32>
    %33 = vector.extract_strided_slice %7 {offsets = [0, 0], sizes = [1, 256], strides = [1, 1]} : vector<4x256xf32> to vector<1x256xf32>
    %34 = vector.extract_strided_slice %3 {offsets = [0, 0], sizes = [1, 256], strides = [1, 1]} : vector<4x256xf32> to vector<1x256xf32>
    %35 = vector.shape_cast %14 : vector<16x1xi1> to vector<16x1xi1>
    %36 = vector.broadcast %35 : vector<16x1xi1> to vector<16x256xi1>
    %37 = vector.shape_cast %33 : vector<1x256xf32> to vector<1x256xf32>
    %38 = vector.broadcast %37 : vector<1x256xf32> to vector<16x256xf32>
    %39 = vector.shape_cast %34 : vector<1x256xf32> to vector<1x256xf32>
    %40 = vector.broadcast %39 : vector<1x256xf32> to vector<16x256xf32>
    %41 = arith.select %36, %38, %40 : vector<16x256xi1>, vector<16x256xf32>
    %42 = vector.extract_strided_slice %7 {offsets = [1, 0], sizes = [1, 256], strides = [1, 1]} : vector<4x256xf32> to vector<1x256xf32>
    %43 = vector.extract_strided_slice %3 {offsets = [1, 0], sizes = [1, 256], strides = [1, 1]} : vector<4x256xf32> to vector<1x256xf32>
    %44 = vector.shape_cast %20 : vector<16x1xi1> to vector<16x1xi1>
    %45 = vector.broadcast %44 : vector<16x1xi1> to vector<16x256xi1>
    %46 = vector.shape_cast %42 : vector<1x256xf32> to vector<1x256xf32>
    %47 = vector.broadcast %46 : vector<1x256xf32> to vector<16x256xf32>
    %48 = vector.shape_cast %43 : vector<1x256xf32> to vector<1x256xf32>
    %49 = vector.broadcast %48 : vector<1x256xf32> to vector<16x256xf32>
    %50 = arith.select %45, %47, %49 : vector<16x256xi1>, vector<16x256xf32>
    %51 = arith.mulf %41, %50 : vector<16x256xf32>
    %52 = vector.extract_strided_slice %7 {offsets = [2, 0], sizes = [1, 256], strides = [1, 1]} : vector<4x256xf32> to vector<1x256xf32>
    %53 = vector.extract_strided_slice %3 {offsets = [2, 0], sizes = [1, 256], strides = [1, 1]} : vector<4x256xf32> to vector<1x256xf32>
    %54 = vector.shape_cast %26 : vector<16x1xi1> to vector<16x1xi1>
    %55 = vector.broadcast %54 : vector<16x1xi1> to vector<16x256xi1>
    %56 = vector.shape_cast %52 : vector<1x256xf32> to vector<1x256xf32>
    %57 = vector.broadcast %56 : vector<1x256xf32> to vector<16x256xf32>
    %58 = vector.shape_cast %53 : vector<1x256xf32> to vector<1x256xf32>
    %59 = vector.broadcast %58 : vector<1x256xf32> to vector<16x256xf32>
    %60 = arith.select %55, %57, %59 : vector<16x256xi1>, vector<16x256xf32>
    %61 = arith.mulf %51, %60 : vector<16x256xf32>
    %62 = vector.extract_strided_slice %7 {offsets = [3, 0], sizes = [1, 256], strides = [1, 1]} : vector<4x256xf32> to vector<1x256xf32>
    %63 = vector.extract_strided_slice %3 {offsets = [3, 0], sizes = [1, 256], strides = [1, 1]} : vector<4x256xf32> to vector<1x256xf32>
    %64 = vector.shape_cast %32 : vector<16x1xi1> to vector<16x1xi1>
    %65 = vector.broadcast %64 : vector<16x1xi1> to vector<16x256xi1>
    %66 = vector.shape_cast %62 : vector<1x256xf32> to vector<1x256xf32>
    %67 = vector.broadcast %66 : vector<1x256xf32> to vector<16x256xf32>
    %68 = vector.shape_cast %63 : vector<1x256xf32> to vector<1x256xf32>
    %69 = vector.broadcast %68 : vector<1x256xf32> to vector<16x256xf32>
    %70 = arith.select %65, %67, %69 : vector<16x256xi1>, vector<16x256xf32>
    %71 = arith.mulf %61, %70 : vector<16x256xf32>
    %c0_12 = arith.constant 0 : index
    %c0_13 = arith.constant 0 : index
    %c0_14 = arith.constant 0 : index
    %72 = vector.load %arg2[%c0_12, %c0_13, %c0_14] : memref<2x16x16xf32, #tpu.memory_space<vmem>>, vector<1x16x16xf32>
    %73 = vector.shape_cast %72 : vector<1x16x16xf32> to vector<16x16xf32>
    %cst_15 = arith.constant dense<0.000000e+00> : vector<16x256xf32>
    %74 = tpu.matmul %73, %71, %cst_15 {dimension_numbers = #tpu.dot_dimension_numbers<[1], [0], [0], [1], [0, 0, 1, 1], [], []>} : vector<16x16xf32>, vector<16x256xf32>, vector<16x256xf32> -> vector<16x256xf32>
    %c8_i32 = arith.constant 8 : i32
    %75 = tpu.dynamic_rotate %74 by %c8_i32 dim 0 : vector<16x256xf32>, i32 -> vector<16x256xf32>
    %cst_16 = arith.constant 0.000000e+00 : f32
    %76 = vector.broadcast %cst_16 : f32 to vector<16x256xf32>
    %77 = arith.subf %76, %75 : vector<16x256xf32>
    %78 = vector.shape_cast %14 : vector<16x1xi1> to vector<16x1xi1>
    %79 = vector.broadcast %78 : vector<16x1xi1> to vector<16x256xi1>
    %80 = arith.select %79, %75, %77 : vector<16x256xi1>, vector<16x256xf32>
    %81 = vector.extract_strided_slice %3 {offsets = [0, 0], sizes = [1, 256], strides = [1, 1]} : vector<4x256xf32> to vector<1x256xf32>
    %82 = vector.broadcast %81 : vector<1x256xf32> to vector<16x256xf32>
    %83 = arith.mulf %82, %74 : vector<16x256xf32>
    %84 = vector.extract_strided_slice %7 {offsets = [0, 0], sizes = [1, 256], strides = [1, 1]} : vector<4x256xf32> to vector<1x256xf32>
    %85 = vector.broadcast %84 : vector<1x256xf32> to vector<16x256xf32>
    %86 = arith.mulf %85, %80 : vector<16x256xf32>
    %87 = arith.addf %83, %86 : vector<16x256xf32>
    %c4_i32 = arith.constant 4 : i32
    %88 = tpu.dynamic_rotate %87 by %c4_i32 dim 0 : vector<16x256xf32>, i32 -> vector<16x256xf32>
    %c12_i32 = arith.constant 12 : i32
    %89 = tpu.dynamic_rotate %87 by %c12_i32 dim 0 : vector<16x256xf32>, i32 -> vector<16x256xf32>
    %cst_17 = arith.constant 0.000000e+00 : f32
    %90 = vector.broadcast %cst_17 : f32 to vector<16x256xf32>
    %91 = arith.subf %90, %89 : vector<16x256xf32>
    %92 = vector.shape_cast %20 : vector<16x1xi1> to vector<16x1xi1>
    %93 = vector.broadcast %92 : vector<16x1xi1> to vector<16x256xi1>
    %94 = arith.select %93, %88, %91 : vector<16x256xi1>, vector<16x256xf32>
    %95 = vector.extract_strided_slice %3 {offsets = [1, 0], sizes = [1, 256], strides = [1, 1]} : vector<4x256xf32> to vector<1x256xf32>
    %96 = vector.broadcast %95 : vector<1x256xf32> to vector<16x256xf32>
    %97 = arith.mulf %96, %87 : vector<16x256xf32>
    %98 = vector.extract_strided_slice %7 {offsets = [1, 0], sizes = [1, 256], strides = [1, 1]} : vector<4x256xf32> to vector<1x256xf32>
    %99 = vector.broadcast %98 : vector<1x256xf32> to vector<16x256xf32>
    %100 = arith.mulf %99, %94 : vector<16x256xf32>
    %101 = arith.addf %97, %100 : vector<16x256xf32>
    %c2_i32_18 = arith.constant 2 : i32
    %102 = tpu.dynamic_rotate %101 by %c2_i32_18 dim 0 : vector<16x256xf32>, i32 -> vector<16x256xf32>
    %c14_i32 = arith.constant 14 : i32
    %103 = tpu.dynamic_rotate %101 by %c14_i32 dim 0 : vector<16x256xf32>, i32 -> vector<16x256xf32>
    %cst_19 = arith.constant 0.000000e+00 : f32
    %104 = vector.broadcast %cst_19 : f32 to vector<16x256xf32>
    %105 = arith.subf %104, %103 : vector<16x256xf32>
    %106 = vector.shape_cast %26 : vector<16x1xi1> to vector<16x1xi1>
    %107 = vector.broadcast %106 : vector<16x1xi1> to vector<16x256xi1>
    %108 = arith.select %107, %102, %105 : vector<16x256xi1>, vector<16x256xf32>
    %109 = vector.extract_strided_slice %3 {offsets = [2, 0], sizes = [1, 256], strides = [1, 1]} : vector<4x256xf32> to vector<1x256xf32>
    %110 = vector.broadcast %109 : vector<1x256xf32> to vector<16x256xf32>
    %111 = arith.mulf %110, %101 : vector<16x256xf32>
    %112 = vector.extract_strided_slice %7 {offsets = [2, 0], sizes = [1, 256], strides = [1, 1]} : vector<4x256xf32> to vector<1x256xf32>
    %113 = vector.broadcast %112 : vector<1x256xf32> to vector<16x256xf32>
    %114 = arith.mulf %113, %108 : vector<16x256xf32>
    %115 = arith.addf %111, %114 : vector<16x256xf32>
    %c1_i32_20 = arith.constant 1 : i32
    %116 = tpu.dynamic_rotate %115 by %c1_i32_20 dim 0 : vector<16x256xf32>, i32 -> vector<16x256xf32>
    %c15_i32 = arith.constant 15 : i32
    %117 = tpu.dynamic_rotate %115 by %c15_i32 dim 0 : vector<16x256xf32>, i32 -> vector<16x256xf32>
    %cst_21 = arith.constant 0.000000e+00 : f32
    %118 = vector.broadcast %cst_21 : f32 to vector<16x256xf32>
    %119 = arith.subf %118, %117 : vector<16x256xf32>
    %120 = vector.shape_cast %32 : vector<16x1xi1> to vector<16x1xi1>
    %121 = vector.broadcast %120 : vector<16x1xi1> to vector<16x256xi1>
    %122 = arith.select %121, %116, %119 : vector<16x256xi1>, vector<16x256xf32>
    %123 = vector.extract_strided_slice %3 {offsets = [3, 0], sizes = [1, 256], strides = [1, 1]} : vector<4x256xf32> to vector<1x256xf32>
    %124 = vector.broadcast %123 : vector<1x256xf32> to vector<16x256xf32>
    %125 = arith.mulf %124, %115 : vector<16x256xf32>
    %126 = vector.extract_strided_slice %7 {offsets = [3, 0], sizes = [1, 256], strides = [1, 1]} : vector<4x256xf32> to vector<1x256xf32>
    %127 = vector.broadcast %126 : vector<1x256xf32> to vector<16x256xf32>
    %128 = arith.mulf %127, %122 : vector<16x256xf32>
    %129 = arith.addf %125, %128 : vector<16x256xf32>
    %c1 = arith.constant 1 : index
    %c0_22 = arith.constant 0 : index
    %c0_23 = arith.constant 0 : index
    %130 = vector.load %arg2[%c1, %c0_22, %c0_23] : memref<2x16x16xf32, #tpu.memory_space<vmem>>, vector<1x16x16xf32>
    %131 = vector.shape_cast %130 : vector<1x16x16xf32> to vector<16x16xf32>
    %cst_24 = arith.constant dense<0.000000e+00> : vector<16x256xf32>
    %132 = tpu.matmul %131, %129, %cst_24 {dimension_numbers = #tpu.dot_dimension_numbers<[1], [0], [0], [1], [0, 0, 1, 1], [], []>} : vector<16x16xf32>, vector<16x256xf32>, vector<16x256xf32> -> vector<16x256xf32>
    %133 = arith.mulf %132, %132 : vector<16x256xf32>
    %134 = vector.extract_strided_slice %133 {offsets = [0, 0], sizes = [8, 256], strides = [1, 1]} : vector<16x256xf32> to vector<8x256xf32>
    %cst_25 = arith.constant dense<0.000000e+00> : vector<256xf32>
    %135 = vector.multi_reduction <add>, %134, %cst_25 [0] : vector<8x256xf32> to vector<256xf32>
    %136 = vector.shape_cast %135 : vector<256xf32> to vector<1x256xf32>
    %137 = vector.extract_strided_slice %133 {offsets = [8, 0], sizes = [8, 256], strides = [1, 1]} : vector<16x256xf32> to vector<8x256xf32>
    %cst_26 = arith.constant dense<0.000000e+00> : vector<256xf32>
    %138 = vector.multi_reduction <add>, %137, %cst_26 [0] : vector<8x256xf32> to vector<256xf32>
    %139 = vector.shape_cast %138 : vector<256xf32> to vector<1x256xf32>
    %140 = arith.subf %136, %139 : vector<1x256xf32>
    %c0_27 = arith.constant 0 : index
    %c0_28 = arith.constant 0 : index
    %141 = vector.load %arg3[%c0_27, %c0_28] : memref<1x256xf32, #tpu.memory_space<vmem>>, vector<1x256xf32>
    tpu.vector_store %arg3[%c0_27, %c0_28], %140 {strides = array<i32>} : memref<1x256xf32, #tpu.memory_space<vmem>>, vector<1x256xf32>,
    return
  }
  func.func @transform_0(%arg0: i32) -> (i32, i32) {
    %c0_i32 = arith.constant 0 : i32
    %c0_i32_0 = arith.constant 0 : i32
    return %c0_i32, %arg0 : i32, i32
  }
  func.func @transform_1(%arg0: i32) -> (i32, i32, i32) {
    %c0_i32 = arith.constant 0 : i32
    %c0_i32_0 = arith.constant 0 : i32
    %c0_i32_1 = arith.constant 0 : i32
    %c0_i32_2 = arith.constant 0 : i32
    return %c0_i32, %c0_i32_0, %c0_i32_1 : i32, i32, i32
  }
  func.func @transform_2(%arg0: i32) -> (i32, i32) {
    %c0_i32 = arith.constant 0 : i32
    %c0_i32_0 = arith.constant 0 : i32
    return %c0_i32, %arg0 : i32, i32
  }
}

</mosaic_0001>

<llo_original>
// kernel: basic_model_torch_layer_forward.2
$region0: #{basic_model_torch_layer_forward.2}
  #allocation0 [shape = 'u32[]', space=smem, size = 0x4, offset = 0x4, fixed_abs, tag = 'smem constant byte address 0x4 - core index']
  #allocation1 [shape = 'u32[144,128]{1,0:T(1,128)}', space=vmem, size = 0x12000, scoped, tag = 'internal scratch']
  #allocation2 [shape = 'u32[2048]{0}', space=vmem, size = 0x2000, scoped, tag = 'scoped memory for basic_model_torch_layer_forward.2']
  #allocation3 [shape = 'u32[2048]{0}', space=vmem, size = 0x2000, scoped, tag = 'scoped memory for basic_model_torch_layer_forward.2']
  #allocation4 [shape = 'u32[2048]{0}', space=vmem, size = 0x2000, scoped, tag = 'scoped memory for basic_model_torch_layer_forward.2']
  #allocation5 [shape = 'u32[2048]{0}', space=vmem, size = 0x2000, scoped, tag = 'scoped memory for basic_model_torch_layer_forward.2']
  #allocation6 [shape = 'u32[2048]{0}', space=vmem, size = 0x2000, scoped, tag = 'scoped memory for basic_model_torch_layer_forward.2']
  %s0 = inlined_call_operand.vmem [shape: f32[2,16,16], index: 0, kind: input, shape index: {}]
  %s1 = inlined_call_operand.vmem [shape: f32[4,8], index: 1, kind: input, shape index: {}]
  %s2 = inlined_call_operand.<no memory space> [shape: f32[], index: 2, kind: input, shape index: {}]
  %s3 = inlined_call_operand.vmem [shape: f32[1,256], index: 3, kind: output, shape index: {}]
  %s4 = sld [smem:[#allocation0]]
  $region18: #{basic_model_torch_layer_forward.2} parent=0
    _
  %s6 = ssub.s32 1, %s4
  %s7 = scalar_select 0, %s6, %s4
  %v8 = vstv %s2
  $region1: #{basic_model_torch_layer_forward.2} parent=0
    #allocation7 [shape = 'u8[4096]{0}', space=vmem, size = 0x1000, dematerialized = true, scoped, tag = 'FusionAdapter Buffer %fusion.65 = f32[4,256]{1,0:T(4,128)} fusion(%param_1.166, %param_2.82), kind=kLoop, calls=%fused_computation.68.clone, metadata={op_name="jit(basic_model_torch_layer_forward)/scatter" stack_frame_id=7}']
    // Predicated region
    $region2: #{basic_model_torch_layer_forward.2} parent=1 // pred_check
      _
    $region3: #{basic_model_torch_layer_forward.2} parent=1 // pred_check_branch
      %10 = sbr.rel (0) target = $region5
    $region4: #{basic_model_torch_layer_forward.2} parent=1 // pred_region
      _
    $region5: #{basic_model_torch_layer_forward.2} parent=1 // pred_fallthru
      _
    // Predicated region
    $region6: #{basic_model_torch_layer_forward.2} parent=1 // pred_check
      _
    $region7: #{basic_model_torch_layer_forward.2} parent=1 // pred_check_branch
      %12 = sbr.rel (0) target = $region9
    $region8: #{basic_model_torch_layer_forward.2} parent=1 // pred_region
      _
    $region9: #{basic_model_torch_layer_forward.2} parent=1 // pred_fallthru
      _
    %v13 = vld [vmem:[%s1] sm:$0xf]
    %v14 = vlaneseq
    %v15 = vshrl.u32 %v14, 7
    %vm17 = vcmp.lt.s32.totalorder %v15, 4
    %v18 = vsel %vm17, %v13, %v8
    %v19 = vlaneseq
    %v20 = vand.u32 %v19, 127
    %vm22 = vcmp.lt.s32.totalorder %v20, 8
    %v23 = vsel %vm22, %v18, %v8
    %25 = vst [vmem:[#allocation7] sm:$0xf] %v23
    %s26 = scalar_lea.vmem [#allocation7], 4
    %28 = vst [vmem:[%s26] sm:$0xf] %v8
    %v29 = vld [vmem:[#allocation7] sm:$0xff]
    %v30 = vmul.f32 %v29, 0.5
    %v31 = vand.u32 2147483647, %v30
    %vm32 = vcmp.le.f32.partialorder %v31, 0.7853982
    %vm33 = vcmp.lt.s32.totalorder %v30, 0
    %v34 = vand.u32 %v30, 2139095040
    %v35 = vshrl.u32 %v34, 23
    %v36 = vsub.s32 %v35, 127
    %v37 = vand.u32 2147483647, %v30
    %v38 = vand.u32 %v37, 8388607
    %v39 = vor.u32 %v38, 8388608
    %v40 = vsub.s32 0, %v39
    %v41 = vadd.s32 %v36, 1
    %vm42 = vcmp.gt.s32.totalorder %v41, 0
    %v43 = vsel %vm42, %v41, 0
    %v44 = vshrl.u32 %v43, 5
    %v45 = vand.u32 %v43, 31
    %v46 = vsub.s32 32, %v45
    %v47 = vshrl.u32 683565275, %v46
    %v48 = vshll.u32 683565275, %v45
    %v49 = vshrl.u32 2475754826, %v46
    %v50 = vor.u32 %v48, %v49
    %v51 = vshll.u32 2475754826, %v45
    %v52 = vshrl.u32 2131351028, %v46
    %v53 = vor.u32 %v51, %v52
    %v54 = vshll.u32 2131351028, %v45
    %v55 = vshrl.u32 2102212464, %v46
    %v56 = vor.u32 %v54, %v55
    %v57 = vshll.u32 2102212464, %v45
    %v58 = vshrl.u32 920167782, %v46
    %v59 = vor.u32 %v57, %v58
    %v60 = vshll.u32 920167782, %v45
    %v61 = vshrl.u32 1326507024, %v46
    %v62 = vor.u32 %v60, %v61
    %vm63 = vcmp.lt.s32.totalorder %v44, 1
    %vm64 = vcmp.lt.s32.totalorder %v44, 2
    %vm65 = vcmp.lt.s32.totalorder %v44, 3
    %vm66 = vcmp.lt.s32.totalorder %v44, 4
    %v67 = vsel %vm63, %v47, %v50
    %v68 = vsel %vm66, %v56, 2102212464
    %v69 = vsel %vm65, %v53, %v68
    %v70 = vsel %vm64, %v67, %v69
    %v71 = vsel %vm63, %v50, %v53
    %v72 = vsel %vm66, %v59, 920167782
    %v73 = vsel %vm65, %v56, %v72
    %v74 = vsel %vm64, %v71, %v73
    %v75 = vsel %vm63, %v53, %v56
    %v76 = vsel %vm66, %v62, 1326507024
    %v77 = vsel %vm65, %v59, %v76
    %v78 = vsel %vm64, %v75, %v77
    %v79 = vshll.u32 %v39, 8
    %v80 = vmul.u32.u64.compose %v79, %v78
    %v81 = vextract.low.u32 %v80
    %v82 = vextract.high.u32 %v80
    %v83 = vmul.u32.u64.compose %v79, %v74
    %v84 = vextract.low.u32 %v83
    %v85 = vextract.high.u32 %v83
    %v86 = vmul.u32 %v79, %v70
    %v87 = vadd.s32 %v82, %v84
    %vm88 = vc.u32 %v82, %v84
    %v89 = vadd.s32 %v85, 1
    %v90 = vsel %vm88, %v89, %v85
    %v91 = vadd.s32 %v86, %v90
    %v92 = vadd.s32 %v91, 536870912
    %v93 = vshrl.u32 %v92, 30
    %v94 = vshll.u32 %v93, 30
    %v95 = vsub.s32 %v91, %v94
    %vm96 = vcmp.lt.s32.totalorder %v95, 0
    %v97 = vsub.s32 0, %v95
    %v98 = vsel %vm96, %v97, %v95
    %v99 = vclz %v98
    %v100 = vsub.s32 %v99, 2
    %vm101 = vcmp.gt.s32.totalorder 0, %v100
    %v102 = vsel %vm101, 0, %v100
    %v103 = vsub.s32 32, %v102
    %v104 = vshll.u32 %v95, %v102
    %v105 = vshrl.u32 %v87, %v103
    %v106 = vor.u32 %v104, %v105
    %v107 = vsub.s32 4294967266, %v102
    %v108 = vadd.s32 %v107, 127
    %v109 = vshll.u32 %v108, 23
    %v110 = vor.u32 4788187, %v109
    %v111 = vand.u32 2147483647, %v110
    %v113 = vcvt.s32.f32 %v106
    %v114 = vmul.f32 %v113, %v111
    %v115 = vxor.u32 %v114, 2147483648
    %v116 = vsel %vm33, %v115, %v114
    %v117 = vsub.s32 4, %v93
    %v118 = vsel %vm33, %v117, %v93
    %v119 = vsel %vm32, %v30, %v116
    %v120 = vsel %vm32, 0, %v118
    %v121 = vcosq.f32.pop %v119
    %v122 = vsinq.f32.pop %v119
    %vm123 = vweird.f32 %v30
    %v124 = vand.u32 %v120, 3
    %vm125 = vcmp.lt.s32.totalorder %v124, 2
    %vm126 = vcmp.eq.s32.totalorder %v124, 0
    %v127 = vxor.u32 %v122, 2147483648
    %v128 = vsel %vm126, %v121, %v127
    %vm129 = vcmp.eq.s32.totalorder %v124, 2
    %v130 = vxor.u32 %v121, 2147483648
    %v131 = vsel %vm129, %v130, %v122
    %v132 = vsel %vm125, %v128, %v131
    %v133 = vsel %vm123, nan, %v132
    %v134 = vand.u32 2147483647, %v30
    %vm135 = vcmp.le.f32.partialorder %v134, 0.7853982
    %vm136 = vcmp.lt.s32.totalorder %v30, 0
    %v137 = vand.u32 %v30, 2139095040
    %v138 = vshrl.u32 %v137, 23
    %v139 = vsub.s32 %v138, 127
    %v140 = vand.u32 2147483647, %v30
    %v141 = vand.u32 %v140, 8388607
    %v142 = vor.u32 %v141, 8388608
    %v143 = vsub.s32 0, %v142
    %v144 = vadd.s32 %v139, 1
    %vm145 = vcmp.gt.s32.totalorder %v144, 0
    %v146 = vsel %vm145, %v144, 0
    %v147 = vshrl.u32 %v146, 5
    %v148 = vand.u32 %v146, 31
    %v149 = vsub.s32 32, %v148
    %v150 = vshrl.u32 683565275, %v149
    %v151 = vshll.u32 683565275, %v148
    %v152 = vshrl.u32 2475754826, %v149
    %v153 = vor.u32 %v151, %v152
    %v154 = vshll.u32 2475754826, %v148
    %v155 = vshrl.u32 2131351028, %v149
    %v156 = vor.u32 %v154, %v155
    %v157 = vshll.u32 2131351028, %v148
    %v158 = vshrl.u32 2102212464, %v149
    %v159 = vor.u32 %v157, %v158
    %v160 = vshll.u32 2102212464, %v148
    %v161 = vshrl.u32 920167782, %v149
    %v162 = vor.u32 %v160, %v161
    %v163 = vshll.u32 920167782, %v148
    %v164 = vshrl.u32 1326507024, %v149
    %v165 = vor.u32 %v163, %v164
    %vm166 = vcmp.lt.s32.totalorder %v147, 1
    %vm167 = vcmp.lt.s32.totalorder %v147, 2
    %vm168 = vcmp.lt.s32.totalorder %v147, 3
    %vm169 = vcmp.lt.s32.totalorder %v147, 4
    %v170 = vsel %vm166, %v150, %v153
    %v171 = vsel %vm169, %v159, 2102212464
    %v172 = vsel %vm168, %v156, %v171
    %v173 = vsel %vm167, %v170, %v172
    %v174 = vsel %vm166, %v153, %v156
    %v175 = vsel %vm169, %v162, 920167782
    %v176 = vsel %vm168, %v159, %v175
    %v177 = vsel %vm167, %v174, %v176
    %v178 = vsel %vm166, %v156, %v159
    %v179 = vsel %vm169, %v165, 1326507024
    %v180 = vsel %vm168, %v162, %v179
    %v181 = vsel %vm167, %v178, %v180
    %v182 = vshll.u32 %v142, 8
    %v183 = vmul.u32.u64.compose %v182, %v181
    %v184 = vextract.low.u32 %v183
    %v185 = vextract.high.u32 %v183
    %v186 = vmul.u32.u64.compose %v182, %v177
    %v187 = vextract.low.u32 %v186
    %v188 = vextract.high.u32 %v186
    %v189 = vmul.u32 %v182, %v173
    %v190 = vadd.s32 %v185, %v187
    %vm191 = vc.u32 %v185, %v187
    %v192 = vadd.s32 %v188, 1
    %v193 = vsel %vm191, %v192, %v188
    %v194 = vadd.s32 %v189, %v193
    %v195 = vadd.s32 %v194, 536870912
    %v196 = vshrl.u32 %v195, 30
    %v197 = vshll.u32 %v196, 30
    %v198 = vsub.s32 %v194, %v197
    %vm199 = vcmp.lt.s32.totalorder %v198, 0
    %v200 = vsub.s32 0, %v198
    %v201 = vsel %vm199, %v200, %v198
    %v202 = vclz %v201
    %v203 = vsub.s32 %v202, 2
    %vm204 = vcmp.gt.s32.totalorder 0, %v203
    %v205 = vsel %vm204, 0, %v203
    %v206 = vsub.s32 32, %v205
    %v207 = vshll.u32 %v198, %v205
    %v208 = vshrl.u32 %v190, %v206
    %v209 = vor.u32 %v207, %v208
    %v210 = vsub.s32 4294967266, %v205
    %v211 = vadd.s32 %v210, 127
    %v212 = vshll.u32 %v211, 23
    %v213 = vor.u32 4788187, %v212
    %v214 = vand.u32 2147483647, %v213
    %v216 = vcvt.s32.f32 %v209
    %v217 = vmul.f32 %v216, %v214
    %v218 = vxor.u32 %v217, 2147483648
    %v219 = vsel %vm136, %v218, %v217
    %v220 = vsub.s32 4, %v196
    %v221 = vsel %vm136, %v220, %v196
    %v222 = vsel %vm135, %v30, %v219
    %v223 = vsel %vm135, 0, %v221
    %v224 = vcosq.f32.pop %v222
    %v225 = vsinq.f32.pop %v222
    %vm226 = vweird.f32 %v30
    %v227 = vadd.s32 %v223, 3
    %v228 = vand.u32 %v227, 3
    %vm229 = vcmp.lt.s32.totalorder %v228, 2
    %vm230 = vcmp.eq.s32.totalorder %v228, 0
    %v231 = vxor.u32 %v225, 2147483648
    %v232 = vsel %vm230, %v224, %v231
    %vm233 = vcmp.eq.s32.totalorder %v228, 2
    %v234 = vxor.u32 %v224, 2147483648
    %v235 = vsel %vm233, %v234, %v225
    %v236 = vsel %vm229, %v232, %v235
    %v237 = vsel %vm226, nan, %v236
    %v238 = vlaneseq
    %v239 = vshrl.u32 %v238, 7
    %v240 = vadd.s32 %v239, 8
    %v241 = vshra.s32 %v239, 3
    %v242 = vshra.s32 %v240, 3
    %v243 = vand.u32 %v241, 1
    %v244 = vand.u32 %v242, 1
    %vm245 = vcmp.eq.s32.totalorder %v243, 1
    %vm246 = vcmp.eq.s32.totalorder %v244, 1
    %v247 = vshra.s32 %v239, 2
    %v248 = vshra.s32 %v240, 2
    %v249 = vand.u32 %v247, 1
    %v250 = vand.u32 %v248, 1
    %vm251 = vcmp.eq.s32.totalorder %v249, 1
    %vm252 = vcmp.eq.s32.totalorder %v250, 1
    %v253 = vshra.s32 %v239, 1
    %v254 = vshra.s32 %v240, 1
    %v255 = vand.u32 %v253, 1
    %v256 = vand.u32 %v254, 1
    %vm257 = vcmp.eq.s32.totalorder %v255, 1
    %vm258 = vcmp.eq.s32.totalorder %v256, 1
    %v259 = vand.u32 %v239, 1
    %v260 = vand.u32 %v240, 1
    %vm261 = vcmp.eq.s32.totalorder %v259, 1
    %vm262 = vcmp.eq.s32.totalorder %v260, 1
    %v263 = vsel %vm245, 1, 0
    %v264 = vsel %vm246, 1, 0
    %vm265 = vcmp.eq.s32.totalorder %v263, 1
    %vm266 = vcmp.eq.s32.totalorder %v264, 1
    %v268 = vlaneseq
    %v269 = vshrl.u32 %v268, 7
    %v270 = vsub.s32 0, %v269
    %v271 = vrot.slane %v237, %v270
    %v272 = vlaneseq
    %v273 = vshrl.u32 %v272, 7
    %v274 = vsub.s32 4, %v273
    %v275 = vrot.slane %v237, %v274
    %v278 = vlaneseq
    %v279 = vshrl.u32 %v278, 7
    %v280 = vsub.s32 0, %v279
    %v281 = vrot.slane %v271, %v280
    %v282 = vlaneseq
    %v283 = vshrl.u32 %v282, 7
    %v284 = vsub.s32 0, %v283
    %v285 = vrot.slane %v275, %v284
    %v287 = vlaneseq
    %v288 = vshrl.u32 %v287, 7
    %v289 = vsub.s32 0, %v288
    %v290 = vrot.slane %v133, %v289
    %v291 = vlaneseq
    %v292 = vshrl.u32 %v291, 7
    %v293 = vsub.s32 4, %v292
    %v294 = vrot.slane %v133, %v293
    %v297 = vlaneseq
    %v298 = vshrl.u32 %v297, 7
    %v299 = vsub.s32 0, %v298
    %v300 = vrot.slane %v290, %v299
    %v301 = vlaneseq
    %v302 = vshrl.u32 %v301, 7
    %v303 = vsub.s32 0, %v302
    %v304 = vrot.slane %v294, %v303
    %v305 = vsel %vm265, %v281, %v300
    %v306 = vsel %vm265, %v285, %v304
    %v307 = vsel %vm266, %v281, %v300
    %v308 = vsel %vm266, %v285, %v304
    %v309 = vsel %vm251, 1, 0
    %v310 = vsel %vm252, 1, 0
    %vm311 = vcmp.eq.s32.totalorder %v309, 1
    %vm312 = vcmp.eq.s32.totalorder %v310, 1
    %v313 = vlaneseq
    %v314 = vshrl.u32 %v313, 7
    %v315 = vsub.s32 1, %v314
    %v316 = vrot.slane %v237, %v315
    %v317 = vlaneseq
    %v318 = vshrl.u32 %v317, 7
    %v319 = vsub.s32 5, %v318
    %v320 = vrot.slane %v237, %v319
    %v323 = vlaneseq
    %v324 = vshrl.u32 %v323, 7
    %v325 = vsub.s32 1, %v324
    %v326 = vrot.slane %v316, %v325
    %v327 = vlaneseq
    %v328 = vshrl.u32 %v327, 7
    %v329 = vsub.s32 1, %v328
    %v330 = vrot.slane %v320, %v329
    %v331 = vlaneseq
    %v332 = vshrl.u32 %v331, 7
    %v333 = vsub.s32 1, %v332
    %v334 = vrot.slane %v133, %v333
    %v335 = vlaneseq
    %v336 = vshrl.u32 %v335, 7
    %v337 = vsub.s32 5, %v336
    %v338 = vrot.slane %v133, %v337
    %v341 = vlaneseq
    %v342 = vshrl.u32 %v341, 7
    %v343 = vsub.s32 1, %v342
    %v344 = vrot.slane %v334, %v343
    %v345 = vlaneseq
    %v346 = vshrl.u32 %v345, 7
    %v347 = vsub.s32 1, %v346
    %v348 = vrot.slane %v338, %v347
    %v349 = vsel %vm311, %v326, %v344
    %v350 = vsel %vm311, %v330, %v348
    %v351 = vsel %vm312, %v326, %v344
    %v352 = vsel %vm312, %v330, %v348
    %v353 = vmul.f32 %v305, %v349
    %v354 = vmul.f32 %v306, %v350
    %v355 = vmul.f32 %v307, %v351
    %v356 = vmul.f32 %v308, %v352
    %v357 = vsel %vm257, 1, 0
    %v358 = vsel %vm258, 1, 0
    %vm359 = vcmp.eq.s32.totalorder %v357, 1
    %vm360 = vcmp.eq.s32.totalorder %v358, 1
    %v361 = vlaneseq
    %v362 = vshrl.u32 %v361, 7
    %v363 = vsub.s32 2, %v362
    %v364 = vrot.slane %v237, %v363
    %v365 = vlaneseq
    %v366 = vshrl.u32 %v365, 7
    %v367 = vsub.s32 6, %v366
    %v368 = vrot.slane %v237, %v367
    %v371 = vlaneseq
    %v372 = vshrl.u32 %v371, 7
    %v373 = vsub.s32 2, %v372
    %v374 = vrot.slane %v364, %v373
    %v375 = vlaneseq
    %v376 = vshrl.u32 %v375, 7
    %v377 = vsub.s32 2, %v376
    %v378 = vrot.slane %v368, %v377
    %v379 = vlaneseq
    %v380 = vshrl.u32 %v379, 7
    %v381 = vsub.s32 2, %v380
    %v382 = vrot.slane %v133, %v381
    %v383 = vlaneseq
    %v384 = vshrl.u32 %v383, 7
    %v385 = vsub.s32 6, %v384
    %v386 = vrot.slane %v133, %v385
    %v389 = vlaneseq
    %v390 = vshrl.u32 %v389, 7
    %v391 = vsub.s32 2, %v390
    %v392 = vrot.slane %v382, %v391
    %v393 = vlaneseq
    %v394 = vshrl.u32 %v393, 7
    %v395 = vsub.s32 2, %v394
    %v396 = vrot.slane %v386, %v395
    %v397 = vsel %vm359, %v374, %v392
    %v398 = vsel %vm359, %v378, %v396
    %v399 = vsel %vm360, %v374, %v392
    %v400 = vsel %vm360, %v378, %v396
    %v401 = vmul.f32 %v353, %v397
    %v402 = vmul.f32 %v354, %v398
    %v403 = vmul.f32 %v355, %v399
    %v404 = vmul.f32 %v356, %v400
    %v405 = vsel %vm261, 1, 0
    %v406 = vsel %vm262, 1, 0
    %vm407 = vcmp.eq.s32.totalorder %v405, 1
    %vm408 = vcmp.eq.s32.totalorder %v406, 1
    %v409 = vlaneseq
    %v410 = vshrl.u32 %v409, 7
    %v411 = vsub.s32 3, %v410
    %v412 = vrot.slane %v237, %v411
    %v413 = vlaneseq
    %v414 = vshrl.u32 %v413, 7
    %v415 = vsub.s32 7, %v414
    %v416 = vrot.slane %v237, %v415
    %v419 = vlaneseq
    %v420 = vshrl.u32 %v419, 7
    %v421 = vsub.s32 3, %v420
    %v422 = vrot.slane %v412, %v421
    %v423 = vlaneseq
    %v424 = vshrl.u32 %v423, 7
    %v425 = vsub.s32 3, %v424
    %v426 = vrot.slane %v416, %v425
    %v427 = vlaneseq
    %v428 = vshrl.u32 %v427, 7
    %v429 = vsub.s32 3, %v428
    %v430 = vrot.slane %v133, %v429
    %v431 = vlaneseq
    %v432 = vshrl.u32 %v431, 7
    %v433 = vsub.s32 7, %v432
    %v434 = vrot.slane %v133, %v433
    %v437 = vlaneseq
    %v438 = vshrl.u32 %v437, 7
    %v439 = vsub.s32 3, %v438
    %v440 = vrot.slane %v430, %v439
    %v441 = vlaneseq
    %v442 = vshrl.u32 %v441, 7
    %v443 = vsub.s32 3, %v442
    %v444 = vrot.slane %v434, %v443
    %v445 = vsel %vm407, %v422, %v440
    %v446 = vsel %vm407, %v426, %v444
    %v447 = vsel %vm408, %v422, %v440
    %v448 = vsel %vm408, %v426, %v444
    %v449 = vmul.f32 %v401, %v445
    %v450 = vmul.f32 %v402, %v446
    %v451 = vmul.f32 %v403, %v447
    %v452 = vmul.f32 %v404, %v448
    %v453 = vld [vmem:[%s0] sm:$0xff]
    %v454 = vld [vmem:[%s0 + $0x8] sm:$0xff]
    %vm455 = vcmask 130048
    %v457 = vsel %vm455, %v453, 0
    %v460 = vsel %vm455, %v454, 0
    %462 = vmatprep.subr.mxu0 %v450
    %463 = vmatpush1.msra.mxu0 %v449
    %464 = vmatprep.subr.mxu0 %v452
    %465 = vmatpush1.msra.mxu0 %v451
    %466 = vmatprep.subr.mxu0 0.0
    %467 = vmatpush1.msra.mxu0 0.0
    %468 = vmatprep.subr.mxu0 0.0
    %469 = vmatpush1.msra.mxu0 0.0
    %470 = vmatprep.subr.mxu0 0.0
    %471 = vmatpush1.msra.mxu0 0.0
    %472 = vmatprep.subr.mxu0 0.0
    %473 = vmatpush1.msra.mxu0 0.0
    %474 = vmatprep.subr.mxu0 0.0
    %475 = vmatpush1.msra.mxu0 0.0
    %476 = vmatprep.subr.mxu0 0.0
    %477 = vmatpush1.msra.mxu0 0.0
    %478 = vmatprep.subr.mxu0 0.0
    %479 = vmatpush1.msra.mxu0 0.0
    %480 = vmatprep.subr.mxu0 0.0
    %481 = vmatpush1.msra.mxu0 0.0
    %482 = vmatprep.subr.mxu0 0.0
    %483 = vmatpush1.msra.mxu0 0.0
    %484 = vmatprep.subr.mxu0 0.0
    %485 = vmatpush1.msra.mxu0 0.0
    %486 = vmatprep.subr.mxu0 0.0
    %487 = vmatpush1.msra.mxu0 0.0
    %488 = vmatprep.subr.mxu0 0.0
    %489 = vmatpush1.msra.mxu0 0.0
    %490 = vmatprep.subr.mxu0 0.0
    %491 = vmatpush1.msra.mxu0 0.0
    %492 = vmatprep.subr.mxu0 0.0
    %493 = vmatpush1.msra.mxu0 0.0
    %494 = vmatprep.subr.mxu0 0.0
    %495 = vmatpush1.msra.mxu0 0.0
    %496 = vmatprep.subr.mxu0 0.0
    %497 = vmatpush1.msra.mxu0 0.0
    %498 = vmatprep.subr.mxu0 0.0
    %499 = vmatpush1.msra.mxu0 0.0
    %500 = vmatprep.subr.mxu0 0.0
    %501 = vmatpush1.msra.mxu0 0.0
    %502 = vmatprep.subr.mxu0 0.0
    %503 = vmatpush1.msra.mxu0 0.0
    %504 = vmatprep.subr.mxu0 0.0
    %505 = vmatpush1.msra.mxu0 0.0
    %506 = vmatprep.subr.mxu0 0.0
    %507 = vmatpush1.msra.mxu0 0.0
    %508 = vmatprep.subr.mxu0 0.0
    %509 = vmatpush1.msra.mxu0 0.0
    %510 = vmatprep.subr.mxu0 0.0
    %511 = vmatpush1.msra.mxu0 0.0
    %512 = vmatprep.subr.mxu0 0.0
    %513 = vmatpush1.msra.mxu0 0.0
    %514 = vmatprep.subr.mxu0 0.0
    %515 = vmatpush1.msra.mxu0 0.0
    %516 = vmatprep.subr.mxu0 0.0
    %517 = vmatpush1.msra.mxu0 0.0
    %518 = vmatprep.subr.mxu0 0.0
    %519 = vmatpush1.msra.mxu0 0.0
    %520 = vmatprep.subr.mxu0 0.0
    %521 = vmatpush1.msra.mxu0 0.0
    %522 = vmatprep.subr.mxu0 0.0
    %523 = vmatpush1.msra.mxu0 0.0
    %524 = vmatprep.subr.mxu0 0.0
    %525 = vmatpush1.msra.mxu0 0.0
    %526 = vmatprep.mubr.f32.mxu0 0.0
    %527 = vmatmul.mubr.f32.gmra.mrb[0].mxu0 %v457
    %v528 = vpop.f32.mrb[0].mxu0
    %v529 = vadd.f32 0.0, %v528
    %v530 = vpop.f32.mrb[0].mxu0
    %v531 = vadd.f32 0.0, %v530
    %532 = vmatprep.mubr.f32.mxu0 0.0
    %533 = vmatmul.mubr.f32.gmra.mrb[0].mxu0 %v460
    %v534 = vpop.f32.mrb[0].mxu0
    %v535 = vadd.f32 0.0, %v534
    %v536 = vpop.f32.mrb[0].mxu0
    %v537 = vadd.f32 0.0, %v536
    %538 = vdwg.mxu0
    %v539 = vsub.f32 0.0, %v535
    %v540 = vsub.f32 0.0, %v537
    %v541 = vsub.f32 0.0, %v529
    %v542 = vsub.f32 0.0, %v531
    %v543 = vsel %vm265, %v535, %v539
    %v544 = vsel %vm265, %v537, %v540
    %v545 = vsel %vm266, %v529, %v541
    %v546 = vsel %vm266, %v531, %v542
    %v547 = vmul.f32 %v300, %v529
    %v548 = vmul.f32 %v304, %v531
    %v549 = vmul.f32 %v300, %v535
    %v550 = vmul.f32 %v304, %v537
    %v551 = vmul.f32 %v281, %v543
    %v552 = vmul.f32 %v285, %v544
    %v553 = vmul.f32 %v281, %v545
    %v554 = vmul.f32 %v285, %v546
    %v555 = vadd.f32 %v547, %v551
    %v556 = vadd.f32 %v548, %v552
    %v557 = vadd.f32 %v549, %v553
    %v558 = vadd.f32 %v550, %v554
    %v559 = vrot.slane %v555, 4
    %v560 = vrot.slane %v556, 4
    %v561 = vrot.slane %v557, 4
    %v562 = vrot.slane %v558, 4
    %vm563 = vcmp.lt.s32.totalorder %v239, 4
    %v564 = vsel %vm563, %v559, %v561
    %v565 = vsel %vm563, %v560, %v562
    %v566 = vsel %vm563, %v561, %v559
    %v567 = vsel %vm563, %v562, %v560
    %v568 = vsub.f32 0.0, %v564
    %v569 = vsub.f32 0.0, %v565
    %v570 = vsub.f32 0.0, %v566
    %v571 = vsub.f32 0.0, %v567
    %v572 = vsel %vm311, %v566, %v568
    %v573 = vsel %vm311, %v567, %v569
    %v574 = vsel %vm312, %v564, %v570
    %v575 = vsel %vm312, %v565, %v571
    %v576 = vmul.f32 %v344, %v555
    %v577 = vmul.f32 %v348, %v556
    %v578 = vmul.f32 %v344, %v557
    %v579 = vmul.f32 %v348, %v558
    %v580 = vmul.f32 %v326, %v572
    %v581 = vmul.f32 %v330, %v573
    %v582 = vmul.f32 %v326, %v574
    %v583 = vmul.f32 %v330, %v575
    %v584 = vadd.f32 %v576, %v580
    %v585 = vadd.f32 %v577, %v581
    %v586 = vadd.f32 %v578, %v582
    %v587 = vadd.f32 %v579, %v583
    %v588 = vrot.slane %v584, 6
    %v589 = vrot.slane %v585, 6
    %v590 = vrot.slane %v586, 6
    %v591 = vrot.slane %v587, 6
    %vm592 = vcmp.lt.s32.totalorder %v239, 2
    %v593 = vsel %vm592, %v588, %v590
    %v594 = vsel %vm592, %v589, %v591
    %v595 = vsel %vm592, %v590, %v588
    %v596 = vsel %vm592, %v591, %v589
    %v597 = vrot.slane %v584, 2
    %v598 = vrot.slane %v585, 2
    %v599 = vrot.slane %v586, 2
    %v600 = vrot.slane %v587, 2
    %vm601 = vcmp.lt.s32.totalorder %v239, 6
    %v602 = vsel %vm601, %v597, %v599
    %v603 = vsel %vm601, %v598, %v600
    %v604 = vsel %vm601, %v599, %v597
    %v605 = vsel %vm601, %v600, %v598
    %v606 = vsub.f32 0.0, %v602
    %v607 = vsub.f32 0.0, %v603
    %v608 = vsub.f32 0.0, %v604
    %v609 = vsub.f32 0.0, %v605
    %v610 = vsel %vm359, %v595, %v606
    %v611 = vsel %vm359, %v596, %v607
    %v612 = vsel %vm360, %v593, %v608
    %v613 = vsel %vm360, %v594, %v609
    %v614 = vmul.f32 %v392, %v584
    %v615 = vmul.f32 %v396, %v585
    %v616 = vmul.f32 %v392, %v586
    %v617 = vmul.f32 %v396, %v587
    %v618 = vmul.f32 %v374, %v610
    %v619 = vmul.f32 %v378, %v611
    %v620 = vmul.f32 %v374, %v612
    %v621 = vmul.f32 %v378, %v613
    %v622 = vadd.f32 %v614, %v618
    %v623 = vadd.f32 %v615, %v619
    %v624 = vadd.f32 %v616, %v620
    %v625 = vadd.f32 %v617, %v621
    %v626 = vrot.slane %v622, 7
    %v627 = vrot.slane %v623, 7
    %v628 = vrot.slane %v624, 7
    %v629 = vrot.slane %v625, 7
    %vm630 = vcmp.lt.s32.totalorder %v239, 1
    %v631 = vsel %vm630, %v626, %v628
    %v632 = vsel %vm630, %v627, %v629
    %v633 = vsel %vm630, %v628, %v626
    %v634 = vsel %vm630, %v629, %v627
    %v635 = vrot.slane %v622, 1
    %v636 = vrot.slane %v623, 1
    %v637 = vrot.slane %v624, 1
    %v638 = vrot.slane %v625, 1
    %vm639 = vcmp.lt.s32.totalorder %v239, 7
    %v640 = vsel %vm639, %v635, %v637
    %v641 = vsel %vm639, %v636, %v638
    %v642 = vsel %vm639, %v637, %v635
    %v643 = vsel %vm639, %v638, %v636
    %v644 = vsub.f32 0.0, %v640
    %v645 = vsub.f32 0.0, %v641
    %v646 = vsub.f32 0.0, %v642
    %v647 = vsub.f32 0.0, %v643
    %v648 = vsel %vm407, %v633, %v644
    %v649 = vsel %vm407, %v634, %v645
    %v650 = vsel %vm408, %v631, %v646
    %v651 = vsel %vm408, %v632, %v647
    %v652 = vmul.f32 %v440, %v622
    %v653 = vmul.f32 %v444, %v623
    %v654 = vmul.f32 %v440, %v624
    %v655 = vmul.f32 %v444, %v625
    %v656 = vmul.f32 %v422, %v648
    %v657 = vmul.f32 %v426, %v649
    %v658 = vmul.f32 %v422, %v650
    %v659 = vmul.f32 %v426, %v651
    %v660 = vadd.f32 %v652, %v656
    %v661 = vadd.f32 %v653, %v657
    %v662 = vadd.f32 %v654, %v658
    %v663 = vadd.f32 %v655, %v659
    %s664 = scalar_lea.vmem %s0, 16
    %v665 = vld [vmem:[%s664] sm:$0xff]
    %v666 = vld [vmem:[%s664 + $0x8] sm:$0xff]
    %v668 = vsel %vm455, %v665, 0
    %v671 = vsel %vm455, %v666, 0
    %673 = vmatprep.subr.mxu0 %v661
    %674 = vmatpush1.msra.mxu0 %v660
    %675 = vmatprep.subr.mxu0 %v663
    %676 = vmatpush1.msra.mxu0 %v662
    %677 = vmatprep.subr.mxu0 0.0
    %678 = vmatpush1.msra.mxu0 0.0
    %679 = vmatprep.subr.mxu0 0.0
    %680 = vmatpush1.msra.mxu0 0.0
    %681 = vmatprep.subr.mxu0 0.0
    %682 = vmatpush1.msra.mxu0 0.0
    %683 = vmatprep.subr.mxu0 0.0
    %684 = vmatpush1.msra.mxu0 0.0
    %685 = vmatprep.subr.mxu0 0.0
    %686 = vmatpush1.msra.mxu0 0.0
    %687 = vmatprep.subr.mxu0 0.0
    %688 = vmatpush1.msra.mxu0 0.0
    %689 = vmatprep.subr.mxu0 0.0
    %690 = vmatpush1.msra.mxu0 0.0
    %691 = vmatprep.subr.mxu0 0.0
    %692 = vmatpush1.msra.mxu0 0.0
    %693 = vmatprep.subr.mxu0 0.0
    %694 = vmatpush1.msra.mxu0 0.0
    %695 = vmatprep.subr.mxu0 0.0
    %696 = vmatpush1.msra.mxu0 0.0
    %697 = vmatprep.subr.mxu0 0.0
    %698 = vmatpush1.msra.mxu0 0.0
    %699 = vmatprep.subr.mxu0 0.0
    %700 = vmatpush1.msra.mxu0 0.0
    %701 = vmatprep.subr.mxu0 0.0
    %702 = vmatpush1.msra.mxu0 0.0
    %703 = vmatprep.subr.mxu0 0.0
    %704 = vmatpush1.msra.mxu0 0.0
    %705 = vmatprep.subr.mxu0 0.0
    %706 = vmatpush1.msra.mxu0 0.0
    %707 = vmatprep.subr.mxu0 0.0
    %708 = vmatpush1.msra.mxu0 0.0
    %709 = vmatprep.subr.mxu0 0.0
    %710 = vmatpush1.msra.mxu0 0.0
    %711 = vmatprep.subr.mxu0 0.0
    %712 = vmatpush1.msra.mxu0 0.0
    %713 = vmatprep.subr.mxu0 0.0
    %714 = vmatpush1.msra.mxu0 0.0
    %715 = vmatprep.subr.mxu0 0.0
    %716 = vmatpush1.msra.mxu0 0.0
    %717 = vmatprep.subr.mxu0 0.0
    %718 = vmatpush1.msra.mxu0 0.0
    %719 = vmatprep.subr.mxu0 0.0
    %720 = vmatpush1.msra.mxu0 0.0
    %721 = vmatprep.subr.mxu0 0.0
    %722 = vmatpush1.msra.mxu0 0.0
    %723 = vmatprep.subr.mxu0 0.0
    %724 = vmatpush1.msra.mxu0 0.0
    %725 = vmatprep.subr.mxu0 0.0
    %726 = vmatpush1.msra.mxu0 0.0
    %727 = vmatprep.subr.mxu0 0.0
    %728 = vmatpush1.msra.mxu0 0.0
    %729 = vmatprep.subr.mxu0 0.0
    %730 = vmatpush1.msra.mxu0 0.0
    %731 = vmatprep.subr.mxu0 0.0
    %732 = vmatpush1.msra.mxu0 0.0
    %733 = vmatprep.subr.mxu0 0.0
    %734 = vmatpush1.msra.mxu0 0.0
    %735 = vmatprep.subr.mxu0 0.0
    %736 = vmatpush1.msra.mxu0 0.0
    %737 = vmatprep.mubr.f32.mxu0 0.0
    %738 = vmatmul.mubr.f32.gmra.mrb[0].mxu0 %v668
    %v739 = vpop.f32.mrb[0].mxu0
    %v740 = vadd.f32 0.0, %v739
    %v741 = vpop.f32.mrb[0].mxu0
    %v742 = vadd.f32 0.0, %v741
    %743 = vmatprep.mubr.f32.mxu0 0.0
    %744 = vmatmul.mubr.f32.gmra.mrb[0].mxu0 %v671
    %v745 = vpop.f32.mrb[0].mxu0
    %v746 = vadd.f32 0.0, %v745
    %v747 = vpop.f32.mrb[0].mxu0
    %v748 = vadd.f32 0.0, %v747
    %749 = vdwg.mxu0
    %v750 = vmul.f32 %v740, %v740
    %v751 = vmul.f32 %v742, %v742
    %v752 = vmul.f32 %v746, %v746
    %v753 = vmul.f32 %v748, %v748
    %v754 = vrot.slane %v750, 4
    %v755 = vadd.f32 %v750, %v754
    %v756 = vrot.slane %v755, 2
    %v757 = vadd.f32 %v755, %v756
    %v758 = vrot.slane %v757, 1
    %v759 = vadd.f32 %v757, %v758
    %v760 = vrot.slane %v751, 4
    %v761 = vadd.f32 %v751, %v760
    %v762 = vrot.slane %v761, 2
    %v763 = vadd.f32 %v761, %v762
    %v764 = vrot.slane %v763, 1
    %v765 = vadd.f32 %v763, %v764
    %v766 = vrot.slane %v752, 4
    %v767 = vadd.f32 %v752, %v766
    %v768 = vrot.slane %v767, 2
    %v769 = vadd.f32 %v767, %v768
    %v770 = vrot.slane %v769, 1
    %v771 = vadd.f32 %v769, %v770
    %v772 = vrot.slane %v753, 4
    %v773 = vadd.f32 %v753, %v772
    %v774 = vrot.slane %v773, 2
    %v775 = vadd.f32 %v773, %v774
    %v776 = vrot.slane %v775, 1
    %v777 = vadd.f32 %v775, %v776
    %v778 = vsub.f32 %v759, %v771
    %v779 = vsub.f32 %v765, %v777
    %v782 = vcombine.low %v778, %v779
    %v784 = vunpack.c.l.s4 1966171168
    %v785 = vunpack.c.0.s8 %v784
    %v786 = vlaneseq
    %v787 = vshrl.u32 %v786, 7
    %v788 = vsub.s32 %v785, %v787
    %v789 = vrot.slane %v782, %v788
    %v791 = vunpack.c.l.s4 1966171168
    %v792 = vunpack.c.0.s8 %v791
    %v793 = vlaneseq
    %v794 = vshrl.u32 %v793, 7
    %v795 = vsub.s32 %v792, %v794
    %v796 = vrot.slane %v789, %v795
    %v798 = vlaneseq
    %vm799 = vcmp.ge.s32.totalorder %v798, 0
    %vm800 = vcmp.lt.s32.totalorder %v798, 256
    %vm801 = vmand %vm799, %vm800
    %802 = vst.msk [vmem:[%s3] sm:$0x3] %vm801, %v796
    // Predicated region
    $region10: #{basic_model_torch_layer_forward.2} parent=1 // pred_check
      _
    $region11: #{basic_model_torch_layer_forward.2} parent=1 // pred_check_branch
      %804 = sbr.rel (0) target = $region13
    $region12: #{basic_model_torch_layer_forward.2} parent=1 // pred_region
      _
    $region13: #{basic_model_torch_layer_forward.2} parent=1 // pred_fallthru
      _
    // Predicated region
    $region14: #{basic_model_torch_layer_forward.2} parent=1 // pred_check
      _
    $region15: #{basic_model_torch_layer_forward.2} parent=1 // pred_check_branch
      %806 = sbr.rel (0) target = $region17
    $region16: #{basic_model_torch_layer_forward.2} parent=1 // pred_region
      _
    $region17: #{basic_model_torch_layer_forward.2} parent=1 // pred_fallthru
      _

</llo_original>
